<compile_context>
chip_gen: v7x
topology: tpu7x:2x2x1
jax: 0.10.0
libtpu: 0.0.40
codegen_flags: <defaults>
</compile_context>

<pallas_src>
import functools

import jax
import jax.numpy as jnp
from jax.experimental import pallas as pl
from jax.experimental.pallas import tpu as pltpu


# ---------------------------------------------------------------------------
# Standalone prefix copy:  out = pe[:, :seq_len, :]   (pure HBM->HBM DMA)
# ---------------------------------------------------------------------------

def _dma_prefix_copy_kernel(chunks, src_ref, dst_ref, sem):
    """chunks: static tuple of (start_row, n_rows); src/dst are HBM refs."""
    copies = []
    for c, (start, rows) in enumerate(chunks):
        cp = pltpu.make_async_copy(
            src_ref.at[pl.ds(start, rows)],
            dst_ref.at[pl.ds(start, rows)],
            sem.at[c],
        )
        cp.start()
        copies.append(cp)
    for cp in copies:
        cp.wait()


def _chunk_rows(n_rows: int, row_bytes: int):
    """Split the prefix into 1-4 contiguous row chunks (one DMA each)."""
    total_bytes = n_rows * row_bytes
    if total_bytes >= 8 * 1024 * 1024:
        n_chunks = 4
    elif total_bytes >= 1 * 1024 * 1024:
        n_chunks = 2
    else:
        n_chunks = 1
    n_chunks = max(1, min(n_chunks, n_rows))
    base, rem = divmod(n_rows, n_chunks)
    chunks, start = [], 0
    for c in range(n_chunks):
        rows = base + (1 if c < rem else 0)
        chunks.append((start, rows))
        start += rows
    return tuple(chunks)


@functools.partial(jax.jit, static_argnums=(1,))
def learnable_positional_embedding(pe: jax.Array, seq_len: int) -> jax.Array:
    """Pallas equivalent of LearnablePositionalEmbedding.forward: pe[:, :seq_len, :]."""
    _, max_len, d_model = pe.shape
    if not (0 < seq_len <= max_len):
        raise ValueError(f"seq_len={seq_len} must be in (0, {max_len}]")
    dtype = pe.dtype
    itemsize = jnp.dtype(dtype).itemsize

    src2d = pe.reshape(max_len, d_model)
    chunks = _chunk_rows(seq_len, d_model * itemsize)
    n_bytes = seq_len * d_model * itemsize

    out2d = pl.pallas_call(
        functools.partial(_dma_prefix_copy_kernel, chunks),
        out_shape=jax.ShapeDtypeStruct((seq_len, d_model), dtype),
        grid_spec=pltpu.PrefetchScalarGridSpec(
            num_scalar_prefetch=0,
            grid=(1,),
            in_specs=[pl.BlockSpec(memory_space=pl.ANY)],   # raw HBM ref
            out_specs=pl.BlockSpec(memory_space=pl.ANY),    # raw HBM ref
            scratch_shapes=[pltpu.SemaphoreType.DMA((len(chunks),))],
        ),
        compiler_params=pltpu.CompilerParams(
            dimension_semantics=("arbitrary",),
        ),
        cost_estimate=pl.CostEstimate(
            flops=0, transcendentals=0, bytes_accessed=2 * n_bytes),
    )(src2d)

    return out2d.reshape(1, seq_len, d_model)


# ---------------------------------------------------------------------------
# Fused variant (recommended integration point):  o = x + pe[:, :seq_len, :]
# The pe prefix is read directly via a BlockSpec; the slice is never
# materialized in HBM.
# ---------------------------------------------------------------------------

def _fused_add_kernel(x_ref, pe_ref, o_ref):
    # x_ref: (1, ts, D), pe_ref: (ts, D) -> broadcasts to (1, ts, D)
    o_ref[...] = x_ref[...] + pe_ref[...]


def _round_up(x: int, m: int) -> int:
    return ((x + m - 1) // m) * m


@jax.jit
def add_positional_embedding(x: jax.Array, pe: jax.Array) -> jax.Array:
    B, S, D = x.shape
    _, max_len, d_model = pe.shape
    assert D == d_model and S <= max_len
    pe2d = pe.reshape(max_len, d_model)

    # Sublane-aligned seq tile (partial trailing block handled by Pallas).
    ts = min(512, _round_up(S, 8))
    grid = (B, pl.cdiv(S, ts))

    return pl.pallas_call(
        _fused_add_kernel,
        out_shape=jax.ShapeDtypeStruct((B, S, D), x.dtype),
        grid_spec=pltpu.PrefetchScalarGridSpec(
            num_scalar_prefetch=0,
            grid=grid,
            in_specs=[
                pl.BlockSpec((1, ts, D), lambda b, s: (b, s, 0)),
                pl.BlockSpec((ts, D), lambda b, s: (s, 0)),
            ],
            out_specs=pl.BlockSpec((1, ts, D), lambda b, s: (b, s, 0)),
        ),
        compiler_params=pltpu.CompilerParams(
            dimension_semantics=("parallel", "parallel"),
            vmem_limit_bytes=32 * 1024 * 1024,
        ),
    )(x, pe2d)


if __name__ == "__main__":
    key = jax.random.PRNGKey(0)
    k_pe, k_x = jax.random.split(key)

    d_model = 32
    max_len = 64          # small stand-in for the default 5000
    batch, seq_len = 2, 8

    # Deterministic parameter init (torch.randn analogue).
    pe = jax.random.normal(k_pe, (1, max_len, d_model), dtype=jnp.float32)
    # Input x only contributes its (static) sequence length.
    x = jax.random.normal(k_x, (batch, seq_len, d_model), dtype=jnp.float32)

    # --- standalone forward (exact module semantics) ---
    out = jax.block_until_ready(learnable_positional_embedding(pe, x.shape[1]))
    ref = pe[:, :seq_len, :]
    assert out.shape == (1, seq_len, d_model)
    assert out.dtype == pe.dtype
    assert jnp.array_equal(out, ref)

    # --- larger slice exercising the multi-descriptor DMA path ---
    pe2 = jax.random.normal(k_pe, (1, 2048, 256), dtype=jnp.float32)
    out2 = jax.block_until_ready(learnable_positional_embedding(pe2, 1500))
    assert out2.shape == (1, 1500, 256)
    assert jnp.array_equal(out2, pe2[:, :1500, :])

    # --- fused consumer variant: x + pe[:, :S, :] without materializing ---
    fused = jax.block_until_ready(add_positional_embedding(x, pe))
    assert fused.shape == x.shape
    assert jnp.array_equal(fused, x + pe[:, :seq_len, :])

    print("KERNEL_OK")
</pallas_src>

<mosaic_0001>
module attributes {stable_mosaic.version = 11 : i64} {
  func.func @_dma_prefix_copy_kernel(%arg0: i32, %arg1: memref<64x32xf32, #tpu.memory_space<any>>, %arg2: memref<8x32xf32, #tpu.memory_space<any>>, %arg3: memref<1x!tpu.dma_semaphore, #tpu.memory_space<semaphore_mem>>) attributes {dimension_semantics = [#tpu.dimension_semantics<arbitrary>], iteration_bounds = array<i64: 1>, scalar_prefetch = 0 : i64, scratch_operands = 1 : i64, tpu.core_type = #tpu.core_type<tc>, window_params = [{}, {}]} {
    %c0_i32 = arith.constant 0 : i32
    %c0_i32_0 = arith.constant 0 : i32
    %c0_i32_1 = arith.constant 0 : i32
    %0 = tpu.memref_slice %arg1[%c0_i32_0, %c0_i32_1] : memref<64x32xf32, #tpu.memory_space<any>> -> memref<8x32xf32, #tpu.memory_space<any>>
    %c0_i32_2 = arith.constant 0 : i32
    %c0_i32_3 = arith.constant 0 : i32
    %1 = tpu.memref_slice %arg2[%c0_i32_2, %c0_i32_3] : memref<8x32xf32, #tpu.memory_space<any>> -> memref<8x32xf32, #tpu.memory_space<any>>
    %2 = tpu.memref_slice %arg3[%c0_i32] : memref<1x!tpu.dma_semaphore, #tpu.memory_space<semaphore_mem>> -> memref<1x!tpu.dma_semaphore, #tpu.memory_space<semaphore_mem>>
    %3 = tpu.memref_squeeze %2 : memref<1x!tpu.dma_semaphore, #tpu.memory_space<semaphore_mem>> -> memref<!tpu.dma_semaphore, #tpu.memory_space<semaphore_mem>>
    tpu.enqueue_dma source(%0 : memref<8x32xf32, #tpu.memory_space<any>>) target(%1 : memref<8x32xf32, #tpu.memory_space<any>>) target_semaphore(%3 : memref<!tpu.dma_semaphore, #tpu.memory_space<semaphore_mem>>)
    %c0_i32_4 = arith.constant 0 : i32
    %c0_i32_5 = arith.constant 0 : i32
    %c0_i32_6 = arith.constant 0 : i32
    %4 = tpu.memref_slice %arg1[%c0_i32_5, %c0_i32_6] : memref<64x32xf32, #tpu.memory_space<any>> -> memref<8x32xf32, #tpu.memory_space<any>>
    %c0_i32_7 = arith.constant 0 : i32
    %c0_i32_8 = arith.constant 0 : i32
    %5 = tpu.memref_slice %arg2[%c0_i32_7, %c0_i32_8] : memref<8x32xf32, #tpu.memory_space<any>> -> memref<8x32xf32, #tpu.memory_space<any>>
    %6 = tpu.memref_slice %arg3[%c0_i32_4] : memref<1x!tpu.dma_semaphore, #tpu.memory_space<semaphore_mem>> -> memref<1x!tpu.dma_semaphore, #tpu.memory_space<semaphore_mem>>
    %7 = tpu.memref_squeeze %6 : memref<1x!tpu.dma_semaphore, #tpu.memory_space<semaphore_mem>> -> memref<!tpu.dma_semaphore, #tpu.memory_space<semaphore_mem>>
    tpu.wait_dma2 semaphore(%7 : memref<!tpu.dma_semaphore, #tpu.memory_space<semaphore_mem>>) src(%4 : memref<8x32xf32, #tpu.memory_space<any>>) dst(%5 : memref<8x32xf32, #tpu.memory_space<any>>)
    return
  }
}

</mosaic_0001>

<llo_original>
// kernel: learnable_positional_embedding.1
$region0: #{learnable_positional_embedding.1}
  #allocation0 [shape = 'u32[]', space=smem, size = 0x4, offset = 0x4, fixed_abs, tag = 'smem constant byte address 0x4 - core index']
  #allocation1 [shape = 'u32[144,128]{1,0:T(1,128)}', space=vmem, size = 0x12000, scoped, tag = 'internal scratch']
  #allocation2 [shape = 's32[1]{0}', space=sflag, size = 0x4, scoped, tag = 'scratch operand']
  #allocation3 [shape = 's32[]', space=sflag, size = 0x4, offset = 0, fixed_abs, tag = 'sflag constant byte address 0x0 - dummy sync flag']
  #allocation4 [shape = 's32[]', space=sflag, size = 0x4, offset = 0, fixed_abs, tag = 'sflag constant byte address 0x0 - dummy sync flag']
  #allocation5 [shape = 'u32[]', space=smem, size = 0x4, offset = 0x44, fixed_abs, tag = 'smem constant byte address 0x44 - assertion arg 0']
  #allocation6 [shape = 'u32[]', space=smem, size = 0x4, offset = 0x48, fixed_abs, tag = 'smem constant byte address 0x48 - assertion arg 1']
  %s0 = inlined_call_operand.vmem [shape: f32[64,32], index: 0, kind: input, shape index: {}]
  %s1 = inlined_call_operand.hbm [shape: f32[8,32], index: 1, kind: output, shape index: {}]
  %s2 = sld [smem:[#allocation0]]
  $region6: #{learnable_positional_embedding.1} parent=0
    _
  %s4 = ssub.s32 1, %s2
  %s5 = scalar_select 0, %s4, %s2
  // Predicated region
  $region2: #{learnable_positional_embedding.1} parent=0 // pred_check
    _
  $region3: #{learnable_positional_embedding.1} parent=0 // pred_check_branch
    %7 = sbr.rel target = $region5
  $region4: #{learnable_positional_embedding.1} parent=0 // pred_region
    %8 = sst [smem:[#allocation5]] [#allocation4]
    %9 = sst [smem:[#allocation6]] [#allocation3]
  $region5: #{learnable_positional_embedding.1} parent=0 // pred_fallthru
    _
  %11 = shalt.err (0)
  %s13 = sshll.u32 %s0, 4
  %s14 = int_to_ptr.vmem [resolvable:$true] %s13
  %16 = dma.vmem_to_hbm [thread:$0]  %s14, 128, %s1, [#allocation2]
  %s17 = smul.u32 8, 1
  %s18 = sshll.u32 %s17, 4
  %19 = dma.done [#allocation2], %s18
  %20 = vsyncmov [#allocation2]
  %s21 = vpop.sfrf %20
  %p22 = scmp.eq.s32.totalorder %s21, 0
  %p23 = pneg %p22
  %25 = shalt.err (%p23)

</llo_original>
